<compile_context>
chip_gen: v7x
topology: tpu7x:2x2x1
jax: 0.10.0
libtpu: 0.0.40
codegen_flags: <defaults>
</compile_context>

<pallas_src>
import functools
import math

import jax
import jax.numpy as jnp
from jax.experimental import pallas as pl
from jax.experimental.pallas import tpu as pltpu

# ShiftedCrossEntropyV2 constants (from the module __init__)
_A = 0.431496
_C = 0.00226817
_LOG1PC = math.log(1.0 + _C)  # folded at trace time

_OUT_SUB = 8     # output slab sublanes (keeps out BlockSpec (8,128)-aligned)
_OUT_LANE = 128  # output slab lanes


def _shifted_ce_v2_tile_kernel(x_ref, tgt_ref, out_ref, *, n_total):
    # x_ref:   (TILE_N, C) logits (any float dtype) in VMEM
    # tgt_ref: (TILE_N, 1) int32 class indices in VMEM
    # out_ref: (8, 128) float32 slab in VMEM; filled with this tile's partial sum
    i = pl.program_id(0)

    x = x_ref[...].astype(jnp.float32)          # upcast on the VPU (free-ish)
    tn, c = x.shape

    # Numerically-stable softmax pieces along the class (lane) axis.
    m = jnp.max(x, axis=-1, keepdims=True)      # (TILE_N, 1)
    e = jnp.exp(x - m)                          # (TILE_N, C)  -- the only big EUP op
    denom = jnp.sum(e, axis=-1, keepdims=True)  # (TILE_N, 1)

    # Gather the target column of the numerator via one-hot mask + lane reduce.
    col = jax.lax.broadcasted_iota(jnp.int32, (tn, c), 1)
    onehot = col == tgt_ref[...]                                   # (TILE_N, C)
    e_tgt = jnp.sum(jnp.where(onehot, e, 0.0), axis=-1, keepdims=True)  # (TILE_N, 1)

    # Transform only the N gathered values (not the full (N, C) matrix).
    sm_tgt = e_tgt / denom                                         # (TILE_N, 1)
    p = (_A * (jnp.log(sm_tgt + _C) - _LOG1PC)) ** 2               # (TILE_N, 1)

    # Mask padded rows of the last partial batch tile.
    row = i * tn + jax.lax.broadcasted_iota(jnp.int32, (tn, 1), 0)
    p = jnp.where(row < n_total, p, 0.0)

    # Per-tile partial sum, broadcast into a lane-dense aligned slab.
    tile_sum = jnp.sum(p, axis=0, keepdims=True)                   # (1, 1)
    out_ref[...] = jnp.broadcast_to(tile_sum, (_OUT_SUB, _OUT_LANE))


def _choose_tile_n(n, c, itemsize):
    # Conservative: 2 double-buffered (TILE_N, C) input tiles + headroom must fit
    # the smallest default scoped-VMEM budget across generations (v5e: 16 MiB).
    budget = 16 * 1024 * 1024
    max_rows = max(8, budget // (4 * c * itemsize))
    tile_n = int(min(n, max_rows, 512))
    if tile_n >= 8:
        tile_n = (tile_n // 8) * 8   # sublane-aligned unless n itself is tiny
    return max(1, tile_n)


def custom_loss(x, target, *, tile_n=None):
    """x: (N, C) float logits (f32 or bf16), target: (N,) ints -> scalar f32 loss."""
    n, c = x.shape
    if tile_n is None:
        tile_n = _choose_tile_n(n, c, jnp.dtype(x.dtype).itemsize)
    tile_n = min(tile_n, n)
    num_tiles = (n + tile_n - 1) // tile_n

    tgt2d = target.reshape(n, 1).astype(jnp.int32)
    kernel = functools.partial(_shifted_ce_v2_tile_kernel, n_total=n)

    partial_slabs = pl.pallas_call(
        kernel,
        out_shape=jax.ShapeDtypeStruct((_OUT_SUB * num_tiles, _OUT_LANE), jnp.float32),
        grid=(num_tiles,),
        in_specs=[
            pl.BlockSpec((tile_n, c), lambda i: (i, 0)),   # logits tile
            pl.BlockSpec((tile_n, 1), lambda i: (i, 0)),   # target indices tile
        ],
        out_specs=pl.BlockSpec((_OUT_SUB, _OUT_LANE), lambda i: (i, 0)),
        compiler_params=pltpu.CompilerParams(
            dimension_semantics=("parallel",),
        ),
    )(x, tgt2d)

    # Each slab is filled with its tile's partial sum; pick one value per tile.
    per_tile = partial_slabs.reshape(num_tiles, _OUT_SUB, _OUT_LANE)[:, 0, 0]
    return jnp.sum(per_tile) / jnp.float32(n)


def _reference_loss(x, target):
    # Pure-JAX reference matching the PyTorch module exactly.
    sm = jax.nn.softmax(x.astype(jnp.float32), axis=-1)
    p = (_A * jnp.log((sm + _C) / (1.0 + _C))) ** 2
    gathered = jnp.take_along_axis(p, target[:, None].astype(jnp.int32), axis=-1)[:, 0]
    return jnp.mean(gathered)


if __name__ == "__main__":
    key = jax.random.PRNGKey(0)
    kx, kt = jax.random.split(key)

    N, C = 16, 128  # small shapes: batch=16, num_classes=128
    x = jax.random.normal(kx, (N, C), dtype=jnp.float32)
    target = jax.random.randint(kt, (N,), 0, C, dtype=jnp.int32)

    # tile_n=8 -> grid of 2 tiles, exercising the tiled/pipelined path.
    loss = custom_loss(x, target, tile_n=8)
    jax.block_until_ready(loss)

    ref = _reference_loss(x, target)
    assert jnp.allclose(loss, ref, rtol=1e-5, atol=1e-6), (loss, ref)

    print("KERNEL_OK")
</pallas_src>

<mosaic_0001>
module attributes {stable_mosaic.version = 11 : i64} {
  func.func @_shifted_ce_v2_tile_kernel(%arg0: i32, %arg1: memref<8x128xf32, #tpu.memory_space<vmem>>, %arg2: memref<8x1xi32, #tpu.memory_space<vmem>>, %arg3: memref<8x128xf32, #tpu.memory_space<vmem>>) attributes {dimension_semantics = [#tpu.dimension_semantics<parallel>], iteration_bounds = array<i64: 2>, scalar_prefetch = 0 : i64, scratch_operands = 0 : i64, tpu.core_type = #tpu.core_type<tc>, window_params = [{transform_indices = @transform_0, window_bounds = array<i64: 8, 128>}, {transform_indices = @transform_1, window_bounds = array<i64: 8, 1>}, {transform_indices = @transform_2, window_bounds = array<i64: 8, 128>}]} {
    %c0 = arith.constant 0 : index
    %c0_0 = arith.constant 0 : index
    %0 = vector.load %arg1[%c0, %c0_0] : memref<8x128xf32, #tpu.memory_space<vmem>>, vector<8x128xf32>
    %cst = arith.constant dense<0xFF800000> : vector<8xf32>
    %1 = vector.multi_reduction <maximumf>, %0, %cst [1] : vector<8x128xf32> to vector<8xf32>
    %2 = vector.shape_cast %1 : vector<8xf32> to vector<8x1xf32>
    %3 = vector.broadcast %2 : vector<8x1xf32> to vector<8x128xf32>
    %4 = arith.subf %0, %3 : vector<8x128xf32>
    %5 = math.exp %4 : vector<8x128xf32>
    %cst_1 = arith.constant dense<0.000000e+00> : vector<8xf32>
    %6 = vector.multi_reduction <add>, %5, %cst_1 [1] : vector<8x128xf32> to vector<8xf32>
    %7 = vector.shape_cast %6 : vector<8xf32> to vector<8x1xf32>
    %8 = tpu.iota {dimensions = array<i32: 1>} : vector<8x128xi32>
    %c0_2 = arith.constant 0 : index
    %c0_3 = arith.constant 0 : index
    %9 = vector.load %arg2[%c0_2, %c0_3] : memref<8x1xi32, #tpu.memory_space<vmem>>, vector<8x1xi32>
    %10 = vector.broadcast %9 : vector<8x1xi32> to vector<8x128xi32>
    %11 = arith.cmpi eq, %8, %10 : vector<8x128xi32>
    %cst_4 = arith.constant 0.000000e+00 : f32
    %12 = vector.broadcast %cst_4 : f32 to vector<8x128xf32>
    %13 = arith.select %11, %5, %12 : vector<8x128xi1>, vector<8x128xf32>
    %cst_5 = arith.constant dense<0.000000e+00> : vector<8xf32>
    %14 = vector.multi_reduction <add>, %13, %cst_5 [1] : vector<8x128xf32> to vector<8xf32>
    %15 = vector.shape_cast %14 : vector<8xf32> to vector<8x1xf32>
    %16 = arith.divf %15, %7 : vector<8x1xf32>
    %cst_6 = arith.constant 2.268170e-03 : f32
    %17 = vector.broadcast %cst_6 : f32 to vector<8x1xf32>
    %18 = arith.addf %16, %17 : vector<8x1xf32>
    %19 = math.log %18 : vector<8x1xf32>
    %cst_7 = arith.constant 0.00226560165 : f32
    %20 = vector.broadcast %cst_7 : f32 to vector<8x1xf32>
    %21 = arith.subf %19, %20 : vector<8x1xf32>
    %cst_8 = arith.constant 4.314960e-01 : f32
    %22 = vector.broadcast %cst_8 : f32 to vector<8x1xf32>
    %23 = arith.mulf %22, %21 : vector<8x1xf32>
    %24 = arith.mulf %23, %23 : vector<8x1xf32>
    %c8_i32 = arith.constant 8 : i32
    %25 = arith.muli %arg0, %c8_i32 : i32
    %26 = tpu.iota {dimensions = array<i32: 0>} : vector<8x1xi32>
    %27 = vector.broadcast %25 : i32 to vector<8x1xi32>
    %28 = arith.addi %27, %26 : vector<8x1xi32>
    %c16_i32 = arith.constant 16 : i32
    %29 = vector.broadcast %c16_i32 : i32 to vector<8x1xi32>
    %30 = arith.cmpi slt, %28, %29 : vector<8x1xi32>
    %cst_9 = arith.constant 0.000000e+00 : f32
    %31 = vector.broadcast %cst_9 : f32 to vector<8x1xf32>
    %32 = arith.select %30, %24, %31 : vector<8x1xi1>, vector<8x1xf32>
    %cst_10 = arith.constant dense<0.000000e+00> : vector<1xf32>
    %33 = vector.multi_reduction <add>, %32, %cst_10 [0] : vector<8x1xf32> to vector<1xf32>
    %34 = vector.shape_cast %33 : vector<1xf32> to vector<1x1xf32>
    %35 = vector.shape_cast %34 : vector<1x1xf32> to vector<1x1xf32>
    %36 = vector.broadcast %35 : vector<1x1xf32> to vector<8x128xf32>
    %c0_11 = arith.constant 0 : index
    %c0_12 = arith.constant 0 : index
    %37 = vector.load %arg3[%c0_11, %c0_12] : memref<8x128xf32, #tpu.memory_space<vmem>>, vector<8x128xf32>
    tpu.vector_store %arg3[%c0_11, %c0_12], %36 {strides = array<i32>} : memref<8x128xf32, #tpu.memory_space<vmem>>, vector<8x128xf32>,
    return
  }
  func.func @transform_0(%arg0: i32) -> (i32, i32) {
    %c0_i32 = arith.constant 0 : i32
    %c0_i32_0 = arith.constant 0 : i32
    return %arg0, %c0_i32 : i32, i32
  }
  func.func @transform_1(%arg0: i32) -> (i32, i32) {
    %c0_i32 = arith.constant 0 : i32
    %c0_i32_0 = arith.constant 0 : i32
    return %arg0, %c0_i32 : i32, i32
  }
  func.func @transform_2(%arg0: i32) -> (i32, i32) {
    %c0_i32 = arith.constant 0 : i32
    %c0_i32_0 = arith.constant 0 : i32
    return %arg0, %c0_i32 : i32, i32
  }
}

</mosaic_0001>

<llo_original>
// kernel: tpu_custom_call.1
$region0: #{tpu_custom_call.1}
  #allocation0 [shape = 'u32[]', space=smem, size = 0x4, offset = 0x4, fixed_abs, tag = 'smem constant byte address 0x4 - core index']
  #allocation1 [shape = 'u32[144,128]{1,0:T(1,128)}', space=vmem, size = 0x12000, scoped, tag = 'internal scratch']
  %s0 = inlined_call_operand.vmem [shape: f32[16,128], index: 0, kind: input, shape index: {}]
  %s1 = inlined_call_operand.vmem [shape: s32[16,1], index: 1, kind: input, shape index: {}]
  %s2 = inlined_call_operand.hbm [shape: f32[16,128], index: 2, kind: output, shape index: {}]
  %s3 = sld [smem:[#allocation0]]
  $region41: #{tpu_custom_call.1} parent=0
    _
  %s5 = ssub.s32 1, %s3
  %s6 = scalar_select 0, %s5, %s3
  $region1: #{tpu_custom_call.1} parent=0
    #allocation2 [shape = 'u8[8192]{0}', space=vmem, size = 0x2000, scoped, tag = 'output window, operand 0']
    #allocation3 [shape = 's32[2]{0}', space=sflag, size = 0x8, scoped, tag = 'scoped memory for tpu_custom_call.1']
    %7 = vsyncpa [#allocation3], 0
    %s8 = scalar_lea.sflag [#allocation3], 1
    %9 = vsyncpa %s8, 0
    loop: start=0, step=1, limit=4
    $region2: #{tpu_custom_call.1} parent=1 // loop_pre_header
      _
    $region3: #{tpu_custom_call.1} parent=1 // loop_header
      %s11 = sphi 0, %s15
      %p12 = scmp.ge.s32.totalorder %s11, 4
      %s21 = sphi 0, %s23
      %s24 = sphi 0, %s21
      %s25 = sphi 0, %s24
      %s41 = sphi 0, %s25
      %s47 = sphi 0, %s49
      %s50 = sphi 0, %s47
      %s51 = sphi 0, %s50
      %s67 = sphi 0, %s51
      %s73 = sphi 0, %s75
      %s76 = sphi 0, %s73
      %s77 = sphi 0, %s76
      %s93 = sphi 0, %s77
    $region4: #{tpu_custom_call.1} parent=1 // loop_header_branch
      %14 = sbr.rel (%p12) target = $region8
    $region5: #{tpu_custom_call.1} parent=1 // loop_body
      %s16 = ssub.s32 %s11, 1
      %s17 = ssub.s32 %s11, 2
      %s18 = sadd.s32 %s11, 1
      %s19 = ssub.s32 %s11, %s18
      %p20 = scmp.eq.s32.totalorder %s19, 0
      %s22 = sadd.s32 %s21, 1
      %s23 = scalar_select %p20, %s21, %s22
      %p26 = pneg %p20
      %p27 = scmp.eq.s32.totalorder %s11, 1
      %p28 = por %p26, %p27
      %p29 = scmp.ne.s32.totalorder %s21, %s24
      %p30 = scmp.eq.s32.totalorder %s11, 0
      %p31 = por %p29, %p30
      %p32 = scmp.ne.s32.totalorder %s21, %s24
      %p33 = scmp.eq.s32.totalorder %s16, 1
      %p34 = por %p32, %p33
      %p35 = scmp.ne.s32.totalorder %s24, %s25
      %p36 = scmp.eq.s32.totalorder %s16, 0
      %p37 = por %p35, %p36
      %p38 = scmp.ne.s32.totalorder %s24, %s25
      %p39 = scmp.eq.s32.totalorder %s17, 1
      %p40 = por %p38, %p39
      %p42 = scmp.ne.s32.totalorder %s25, %s41
      %p43 = scmp.eq.s32.totalorder %s17, 0
      %p44 = por %p42, %p43
      %s45 = ssub.s32 %s11, %s18
      %p46 = scmp.eq.s32.totalorder %s45, 0
      %s48 = sadd.s32 %s47, 1
      %s49 = scalar_select %p46, %s47, %s48
      %p52 = pneg %p46
      %p53 = scmp.eq.s32.totalorder %s11, 1
      %p54 = por %p52, %p53
      %p55 = scmp.ne.s32.totalorder %s47, %s50
      %p56 = scmp.eq.s32.totalorder %s11, 0
      %p57 = por %p55, %p56
      %p58 = scmp.ne.s32.totalorder %s47, %s50
      %p59 = scmp.eq.s32.totalorder %s16, 1
      %p60 = por %p58, %p59
      %p61 = scmp.ne.s32.totalorder %s50, %s51
      %p62 = scmp.eq.s32.totalorder %s16, 0
      %p63 = por %p61, %p62
      %p64 = scmp.ne.s32.totalorder %s50, %s51
      %p65 = scmp.eq.s32.totalorder %s17, 1
      %p66 = por %p64, %p65
      %p68 = scmp.ne.s32.totalorder %s51, %s67
      %p69 = scmp.eq.s32.totalorder %s17, 0
      %p70 = por %p68, %p69
      %s71 = ssub.s32 %s11, %s18
      %p72 = scmp.eq.s32.totalorder %s71, 0
      %s74 = sadd.s32 %s73, 1
      %s75 = scalar_select %p72, %s73, %s74
      %p78 = pneg %p72
      %p79 = scmp.eq.s32.totalorder %s11, 1
      %p80 = por %p78, %p79
      %p81 = scmp.ne.s32.totalorder %s73, %s76
      %p82 = scmp.eq.s32.totalorder %s11, 0
      %p83 = por %p81, %p82
      %p84 = scmp.ne.s32.totalorder %s73, %s76
      %p85 = scmp.eq.s32.totalorder %s16, 1
      %p86 = por %p84, %p85
      %p87 = scmp.ne.s32.totalorder %s76, %s77
      %p88 = scmp.eq.s32.totalorder %s16, 0
      %p89 = por %p87, %p88
      %p90 = scmp.ne.s32.totalorder %s76, %s77
      %p91 = scmp.eq.s32.totalorder %s17, 1
      %p92 = por %p90, %p91
      %p94 = scmp.ne.s32.totalorder %s77, %s93
      %p95 = scmp.eq.s32.totalorder %s17, 0
      %p96 = por %p94, %p95
      %p97 = scmp.le.s32.totalorder 1, %s11
      %p98 = scmp.lt.s32.totalorder %s11, 3
      %p99 = pnand %p97, %p98
      %p100 = pneg %p99
      // Predicated region
      $region9: #{tpu_custom_call.1} parent=5 // pred_check
        _
      $region10: #{tpu_custom_call.1} parent=5 // pred_check_branch
        %102 = sbr.rel (%p99) target = $region12
      $region11: #{tpu_custom_call.1} parent=5 // pred_region
        %s103 = ssub.s32 %s11, 1
      $region12: #{tpu_custom_call.1} parent=5 // pred_fallthru
        _
      %p104 = scmp.lt.s32.totalorder %s11, 2
      // Predicated region
      $region13: #{tpu_custom_call.1} parent=5 // pred_check
        %p105 = pneg %p104
      $region14: #{tpu_custom_call.1} parent=5 // pred_check_branch
        %107 = sbr.rel (%p105) target = $region16
      $region15: #{tpu_custom_call.1} parent=5 // pred_region
        // Predicated region
        $region17: #{tpu_custom_call.1} parent=15 // pred_check
          %p108 = pneg %p31
        $region18: #{tpu_custom_call.1} parent=15 // pred_check_branch
          %110 = sbr.rel (%p108) target = $region20
        $region19: #{tpu_custom_call.1} parent=15 // pred_region
          %p111 = scmp.lt.s32.totalorder %s11, 1
          %s112 = scalar_select %p111, %s11, 1
          %s113 = smul.addr %s112, 8
          %s114 = scalar_lea.vmem %s0, %s113
        $region20: #{tpu_custom_call.1} parent=15 // pred_fallthru
          _
        // Predicated region
        $region21: #{tpu_custom_call.1} parent=15 // pred_check
          %p115 = pneg %p57
        $region22: #{tpu_custom_call.1} parent=15 // pred_check_branch
          %117 = sbr.rel (%p115) target = $region24
        $region23: #{tpu_custom_call.1} parent=15 // pred_region
          %p118 = scmp.lt.s32.totalorder %s11, 1
          %s119 = scalar_select %p118, %s11, 1
          %s120 = smul.addr %s119, 8
          %s121 = scalar_lea.vmem %s1, %s120
        $region24: #{tpu_custom_call.1} parent=15 // pred_fallthru
          _
      $region16: #{tpu_custom_call.1} parent=5 // pred_fallthru
        _
      %p122 = scmp.le.s32.totalorder 1, %s11
      %p123 = scmp.lt.s32.totalorder %s11, 3
      %p124 = pnand %p122, %p123
      %p125 = pneg %p124
      // Predicated region
      $region25: #{tpu_custom_call.1} parent=5 // pred_check
        _
      $region26: #{tpu_custom_call.1} parent=5 // pred_check_branch
        %127 = sbr.rel (%p124) target = $region28
      $region27: #{tpu_custom_call.1} parent=5 // pred_region
        %s128 = ssub.s32 %s11, 1
        %p129 = scmp.lt.s32.totalorder %s16, 1
        %s130 = scalar_select %p129, %s16, 1
        %s131 = smul.addr %s130, 8
        %s132 = scalar_lea.vmem %s0, %s131
        %p133 = pneg %p37
        %p134 = pneg %p34
        %p135 = scmp.lt.s32.totalorder %s16, 1
        %s136 = scalar_select %p135, %s16, 1
        %s137 = smul.addr %s136, 8
        %s138 = scalar_lea.vmem %s1, %s137
        %p139 = pneg %p63
        %p140 = pneg %p60
        %p141 = pneg %p89
        %p142 = pneg %p86
        %s143 = sand.u32 %s76, 1
        %s144 = scalar_lea.sflag [#allocation3], %s143
        %s145 = sand.u32 %s76, 1
        %s146 = smul.addr %s145, 8
        %s147 = scalar_lea.vmem [#allocation2], %s146
        %p148 = scmp.lt.s32.totalorder %s16, 1
        %s149 = scalar_select %p148, %s16, 1
        %s150 = smul.addr %s149, 8
        %s151 = scalar_lea.vmem %s0, %s150
        %p152 = scmp.lt.s32.totalorder %s16, 1
        %s153 = scalar_select %p152, %s16, 1
        %s154 = smul.addr %s153, 8
        %s155 = scalar_lea.vmem %s1, %s154
        %v156 = vld [vmem:[%s151] sm:$0xff]
        %157 = vmax.xlane.f32.xlu0 %v156
        %v158 = vpop.xlane.xlu0 %157
        %v159 = vsub.f32 %v156, %v158
        %v160 = vmul.f32 %v159, 1.442695
        %v161 = vpow.pop %v160
        %162 = vadd.xlane.f32.xlu0 %v161
        %v163 = vpop.xlane.xlu0 %162
        %v164 = vlaneseq
        %v165 = vand.u32 %v164, 127
        %v166 = vld [vmem:[%s155] sm:$0xff]
        %167 = vset.pattern.permute.xlu0 0
        %168 = vperm.xlu0 %167, %v166
        %v169 = vpop.permute.xlu0 %168
        %vm170 = vcmp.eq.s32.totalorder %v165, %v169
        %v171 = vsel %vm170, %v161, 0.0
        %172 = vadd.xlane.f32.xlu0 %v171
        %v173 = vpop.xlane.xlu0 %172
        %v174 = vrcp.pop %v163
        %v175 = vmul.f32 %v173, %v174
        %v176 = vadd.f32 %v175, 0.00226817
        %v177 = vlog2.pop %v176
        %v178 = vmul.f32 %v177, 0.6931472
        %v179 = vsub.f32 %v178, 0.0022656017
        %v180 = vmul.f32 %v179, 0.431496
        %v181 = vmul.f32 %v180, %v180
        %s182 = smul.u32 %s16, 8
        %v183 = vlaneseq
        %v184 = vshrl.u32 %v183, 7
        %v185 = vstv %s182
        %v186 = vadd.s32 %v185, %v184
        %vm187 = vcmp.lt.s32.totalorder %v186, 16
        %v188 = vsel %vm187, %v181, 0.0
        %v189 = vrot.slane %v188, 4
        %v190 = vadd.f32 %v188, %v189
        %v191 = vrot.slane %v190, 2
        %v192 = vadd.f32 %v190, %v191
        %v193 = vrot.slane %v192, 1
        %v194 = vadd.f32 %v192, %v193
        %195 = vst [vmem:[%s147] sm:$0xff] %v194
        %s196 = sand.u32 %s76, 1
        %s197 = scalar_lea.sflag [#allocation3], %s196
        %s198 = sand.u32 %s76, 1
        %s199 = smul.addr %s198, 8
        %s200 = scalar_lea.vmem [#allocation2], %s199
        // Predicated region
        $region29: #{tpu_custom_call.1} parent=27 // pred_check
          %p201 = pneg %p86
        $region30: #{tpu_custom_call.1} parent=27 // pred_check_branch
          %203 = sbr.rel (%p201) target = $region32
        $region31: #{tpu_custom_call.1} parent=27 // pred_region
          %s205 = ssub.s32 128, 128
          %206 = vsyncadd %s197, %s205
          %s207 = smul.addr %s16, 128
          %s208 = scalar_lea.hbm %s2, %s207
          %s210 = sshll.u32 %s200, 4
          %s211 = int_to_ptr.vmem [resolvable:$true] %s210
          %213 = dma.vmem_to_hbm [thread:$0]  %s211, 128, %s208, %s197
        $region32: #{tpu_custom_call.1} parent=27 // pred_fallthru
          _
      $region28: #{tpu_custom_call.1} parent=5 // pred_fallthru
        _
      %p214 = scmp.le.s32.totalorder 2, %s11
      // Predicated region
      $region33: #{tpu_custom_call.1} parent=5 // pred_check
        %p215 = pneg %p214
      $region34: #{tpu_custom_call.1} parent=5 // pred_check_branch
        %217 = sbr.rel (%p215) target = $region36
      $region35: #{tpu_custom_call.1} parent=5 // pred_region
        %s218 = ssub.s32 %s11, 2
        // Predicated region
        $region37: #{tpu_custom_call.1} parent=35 // pred_check
          %p219 = pneg %p92
        $region38: #{tpu_custom_call.1} parent=35 // pred_check_branch
          %221 = sbr.rel (%p219) target = $region40
        $region39: #{tpu_custom_call.1} parent=35 // pred_region
          %s222 = sand.u32 %s77, 1
          %s223 = scalar_lea.sflag [#allocation3], %s222
          %s224 = sand.u32 %s77, 1
          %s225 = smul.addr %s224, 8
          %s226 = scalar_lea.vmem [#allocation2], %s225
          %227 = dma.done %s223, 128
        $region40: #{tpu_custom_call.1} parent=35 // pred_fallthru
          _
      $region36: #{tpu_custom_call.1} parent=5 // pred_fallthru
        _
    $region6: #{tpu_custom_call.1} parent=1 // loop_footer
      %s15 = sadd.s32 1, %s11
    $region7: #{tpu_custom_call.1} parent=1 // loop_footer_branch
      %10 = sbr.rel target = $region3
    $region8: #{tpu_custom_call.1} parent=1 // loop_exit
      _
    %228 = vsyncpa [#allocation3], 1
    %s229 = scalar_lea.sflag [#allocation3], 1
    %230 = vsyncpa %s229, 1

</llo_original>
